<compile_context>
chip_gen: v7x
topology: tpu7x:2x2x1
jax: 0.10.0
libtpu: 0.0.40
codegen_flags: <defaults>
</compile_context>

<pallas_src>
import functools

import jax
import jax.numpy as jnp
from jax import lax
from jax.experimental import pallas as pl
from jax.experimental.pallas import tpu as pltpu


_LANE = 128
_ROW_ALIGN = 256                        # sublane-friendly for f32(8)/bf16(16)/int8(32)
_VMEM_STREAM_BUDGET = 16 * 1024 * 1024  # double-buffered x stream budget (fits v7x 64 MiB VMEM)
_HBM_BYTES_PER_STEP = 4 * 1024 * 1024   # target useful HBM bytes per grid step
_MIN_BYTES_FOR_PALLAS = 512 * 1024      # below this, XLA's fused matvec wins


def _round_up(x, m):
    return ((x + m - 1) // m) * m


# ---------------------------------------------------------------------------
# Kernels
# ---------------------------------------------------------------------------

def _row_scores(x_f32, w_ref, b_ref):
    """(tile_n, D) rows -> (1, tile_n) lane-dense scores."""
    # w_ref is (8, D) with 8 identical rows (avoids an M=1 MXU operand); contract D
    # against x's last dim so the row index lands on the *lane* axis of the result.
    acc = lax.dot_general(
        w_ref[...], x_f32,
        dimension_numbers=(((1,), (1,)), ((), ())),
        preferred_element_type=jnp.float32)            # (8, tile_n), rows identical
    return acc[0:1, :] + b_ref[0]                      # (1, tile_n) f32


def _fc_kernel(x_ref, w_ref, b_ref, o_ref):
    # x_ref: (tile_n, D) pipelined rows    w_ref: (8, D) f32 resident
    # b_ref: (1,) f32 in SMEM              o_ref: (1, tile_n) lane-dense output row
    x = x_ref[...].astype(jnp.float32)
    o_ref[...] = _row_scores(x, w_ref, b_ref).astype(o_ref.dtype)


def _fc_gather_kernel(idx_ref, emb_ref, w_ref, b_ref, o_ref, xbuf_ref, sem,
                      *, tile_n):
    # idx_ref: (padded_N,) int32 in SMEM (scalar prefetch)
    # emb_ref: (num_nodes, D) left in HBM (pl.ANY)
    # xbuf_ref: (tile_n, D) VMEM scratch, sem: DMA semaphore shared by the row DMAs
    base = pl.program_id(0) * tile_n

    @pl.loop(0, tile_n)
    def _issue(r):
        row = idx_ref[base + r]
        pltpu.make_async_copy(emb_ref.at[pl.ds(row, 1)],
                              xbuf_ref.at[pl.ds(r, 1)], sem).start()

    @pl.loop(0, tile_n)
    def _drain(r):
        # Wait descriptor only needs the semaphore + a dst of the same size.
        pltpu.make_async_copy(emb_ref.at[pl.ds(0, 1)],
                              xbuf_ref.at[pl.ds(r, 1)], sem).wait()

    x = xbuf_ref[...].astype(jnp.float32)
    o_ref[...] = _row_scores(x, w_ref, b_ref).astype(o_ref.dtype)


# ---------------------------------------------------------------------------
# Tiling / VMEM budgeting
# ---------------------------------------------------------------------------

def _choose_tile_n(n_rows, d, x_itemsize, out_itemsize):
    dp = _round_up(max(d, 1), _LANE)
    # Real VMEM bytes per row in flight: lane-padded, double-buffered x stream,
    # the (8, tile_n) f32 matmul result, and the double-buffered output row.
    row_vmem = 2 * dp * x_itemsize + 8 * 4 + 2 * max(out_itemsize, 4)
    vmem_cap = max(_ROW_ALIGN,
                   (_VMEM_STREAM_BUDGET // row_vmem) // _ROW_ALIGN * _ROW_ALIGN)
    # Amortize the ~0.35us per-grid-step overhead: size by useful HBM bytes, not rows.
    hbm_rows = _round_up(pl.cdiv(_HBM_BYTES_PER_STEP, max(d * x_itemsize, 1)),
                         _ROW_ALIGN)
    tile = min(vmem_cap, hbm_rows)
    need = _round_up(n_rows, _ROW_ALIGN)
    if need <= tile and n_rows >= 1024:
        # Prefer >= 2 grid blocks so a megacore (v7x) can split across TensorCores.
        tile = _round_up(pl.cdiv(n_rows, 2), _ROW_ALIGN)
    return max(_ROW_ALIGN, min(tile, need))


def _vmem_limit_bytes(tile_n, d, x_itemsize, out_itemsize):
    dp = _round_up(max(d, 1), _LANE)
    foot = 2 * tile_n * dp * x_itemsize        # double-buffered x stream / gather scratch
    foot += 8 * tile_n * 4                     # (8, tile_n) f32 dot result
    foot += 2 * tile_n * max(out_itemsize, 4)  # double-buffered output row
    foot += 8 * dp * 4                         # resident weight
    # >=32 MiB lifts v5e's 16 MiB default; <=48 MiB stays safe on v7x's 64 MiB VMEM.
    return int(min(max(32 * 1024 * 1024, foot + 16 * 1024 * 1024), 48 * 1024 * 1024))


# ---------------------------------------------------------------------------
# Wrappers
# ---------------------------------------------------------------------------

def fc_unit_pallas(x, weight, bias, *, tile_n=None,
                   min_bytes_for_pallas=_MIN_BYTES_FOR_PALLAS):
    """y = x @ weight + bias, returned as (N,)  -- Linear(D, 1).squeeze(1)."""
    x = jnp.asarray(x)
    n, d = x.shape
    out_dtype = x.dtype
    if n == 0:
        return jnp.zeros([1], dtype=out_dtype)

    w = jnp.asarray(weight, jnp.float32).reshape(-1)
    b = jnp.asarray(bias, jnp.float32).reshape(1)
    if n * d * x.dtype.itemsize < min_bytes_for_pallas:
        # Tiny problems: a pallas_call launch costs more than the work.
        return (x.astype(jnp.float32) @ w + b[0]).astype(out_dtype)

    out_itemsize = jnp.dtype(out_dtype).itemsize
    if tile_n is None:
        tile_n = _choose_tile_n(n, d, x.dtype.itemsize, out_itemsize)
    num_tiles = pl.cdiv(n, tile_n)
    padded_n = num_tiles * tile_n

    w8 = jnp.tile(w.reshape(1, d), (8, 1))      # 8 identical rows for the MXU LHS

    out = pl.pallas_call(
        _fc_kernel,
        out_shape=jax.ShapeDtypeStruct((1, padded_n), out_dtype),
        grid_spec=pltpu.PrefetchScalarGridSpec(
            num_scalar_prefetch=0,
            grid=(num_tiles,),
            in_specs=[
                pl.BlockSpec((tile_n, d), lambda i: (i, 0)),        # pipelined x rows
                pl.BlockSpec((8, d), lambda i: (0, 0)),             # resident f32 weight
                pl.BlockSpec(memory_space=pltpu.MemorySpace.SMEM),  # f32 bias scalar
            ],
            out_specs=pl.BlockSpec((1, tile_n), lambda i: (0, i)),  # lane-dense row
        ),
        compiler_params=pltpu.CompilerParams(
            dimension_semantics=("parallel",),
            vmem_limit_bytes=_vmem_limit_bytes(tile_n, d, x.dtype.itemsize,
                                               out_itemsize),
        ),
    )(x, w8, b)
    return out[0, :n]


def fc_unit_gather_pallas(embedding, indices, weight, bias, *, tile_n=None,
                          min_bytes_for_pallas=_MIN_BYTES_FOR_PALLAS):
    """y[i] = embedding[indices[i]] @ weight + bias, gather fused into the kernel."""
    embedding = jnp.asarray(embedding)
    indices = jnp.asarray(indices, jnp.int32)
    n = indices.shape[0]
    _, d = embedding.shape
    out_dtype = embedding.dtype
    if n == 0:
        return jnp.zeros([1], dtype=out_dtype)

    w = jnp.asarray(weight, jnp.float32).reshape(-1)
    b = jnp.asarray(bias, jnp.float32).reshape(1)
    if n * d * embedding.dtype.itemsize < min_bytes_for_pallas:
        x = embedding[indices]
        return (x.astype(jnp.float32) @ w + b[0]).astype(out_dtype)

    out_itemsize = jnp.dtype(out_dtype).itemsize
    if tile_n is None:
        # Cap the per-step DMA-issue loop length for the scattered row gather.
        tile_n = min(_choose_tile_n(n, d, embedding.dtype.itemsize, out_itemsize),
                     2048)
    num_tiles = pl.cdiv(n, tile_n)
    padded_n = num_tiles * tile_n
    # Pad the index vector so every grid step issues exactly tile_n row fetches;
    # padded rows land in out[0, n:] and are sliced away.
    if padded_n != n:
        idx = jnp.concatenate([indices, jnp.zeros((padded_n - n,), jnp.int32)])
    else:
        idx = indices

    w8 = jnp.tile(w.reshape(1, d), (8, 1))

    kernel = functools.partial(_fc_gather_kernel, tile_n=tile_n)
    out = pl.pallas_call(
        kernel,
        out_shape=jax.ShapeDtypeStruct((1, padded_n), out_dtype),
        grid_spec=pltpu.PrefetchScalarGridSpec(
            num_scalar_prefetch=1,                                   # node indices -> SMEM
            grid=(num_tiles,),
            in_specs=[
                pl.BlockSpec(memory_space=pl.ANY),                   # embedding stays in HBM
                pl.BlockSpec((8, d), lambda i, idx_ref: (0, 0)),     # resident f32 weight
                pl.BlockSpec(memory_space=pltpu.MemorySpace.SMEM),   # f32 bias scalar
            ],
            out_specs=pl.BlockSpec((1, tile_n), lambda i, idx_ref: (0, i)),
            scratch_shapes=[
                pltpu.VMEM((tile_n, d), embedding.dtype),            # gathered row tile
                pltpu.SemaphoreType.DMA(()),                         # shared by the row DMAs
            ],
        ),
        compiler_params=pltpu.CompilerParams(
            dimension_semantics=("arbitrary",),
            vmem_limit_bytes=_vmem_limit_bytes(tile_n, d,
                                               embedding.dtype.itemsize,
                                               out_itemsize),
        ),
    )(idx, embedding, w8, b)
    return out[0, :n]


# ---------------------------------------------------------------------------
# Module port
# ---------------------------------------------------------------------------

def node_selector(embedding, graph):
    """Reference selector: gather a subset of node embeddings."""
    return embedding[graph["node_indices"]]


def node_index_fn(embedding, graph):
    """Exposes the selector's row indices so the gather can be fused into the kernel."""
    return graph.get("node_indices")


class FullyConnectedUnit:
    """JAX/Pallas port of the PyTorch FullyConnectedUnit (Linear(num_inputs,1).squeeze(1))."""

    def __init__(self, num_inputs, selector, key, scope_fn=None,
                 index_fn=node_index_fn):
        kw, kb = jax.random.split(key)
        bound = 1.0 / (num_inputs ** 0.5)   # torch.nn.Linear default U(-1/sqrt(fan_in), +)
        self.weight = jax.random.uniform(kw, (num_inputs,), jnp.float32, -bound, bound)
        self.bias = jax.random.uniform(kb, (1,), jnp.float32, -bound, bound)
        self.selector = selector
        self.scope_fn = scope_fn            # unused in forward (matches reference)
        self.index_fn = index_fn

    def __call__(self, embedding, graph):
        idx = self.index_fn(embedding, graph) if self.index_fn is not None else None
        if idx is not None:
            if idx.shape[0] == 0:
                return jnp.zeros([1], dtype=jnp.asarray(embedding).dtype)
            return fc_unit_gather_pallas(embedding, idx, self.weight, self.bias)
        x = self.selector(embedding, graph)
        if x.shape[0] == 0:
            return jnp.zeros([1], dtype=x.dtype)
        return fc_unit_pallas(x, self.weight, self.bias)


if __name__ == "__main__":
    key = jax.random.PRNGKey(0)
    k_emb, k_mod, k_idx, k_x1, k_x2 = jax.random.split(key, 5)

    hidden = 32
    num_nodes = 640
    embedding = jax.random.normal(k_emb, (num_nodes, hidden), jnp.float32)
    unit = FullyConnectedUnit(hidden, node_selector, k_mod)

    # 1) Module-level call on a tiny graph (bytes-gated fallback) + empty graph.
    small_graph = {"node_indices": jnp.array([0, 2, 3, 5, 7, 8, 11, 13], jnp.int32)}
    y_small = jax.block_until_ready(unit(embedding, small_graph))
    ref_small = embedding[small_graph["node_indices"]] @ unit.weight + unit.bias[0]
    assert y_small.shape == (8,)
    assert jnp.allclose(y_small, ref_small, atol=1e-5, rtol=1e-5)

    y_empty = unit(embedding, {"node_indices": jnp.zeros((0,), jnp.int32)})
    assert y_empty.shape == (1,) and float(y_empty[0]) == 0.0

    # 2) Fused gather kernel (scalar-prefetched indices + manual HBM row DMAs).
    idx = jax.random.randint(k_idx, (700,), 0, num_nodes, dtype=jnp.int32)
    y_gather = jax.block_until_ready(
        fc_unit_gather_pallas(embedding, idx, unit.weight, unit.bias,
                              tile_n=256, min_bytes_for_pallas=0))
    ref_gather = embedding[idx] @ unit.weight + unit.bias[0]
    assert y_gather.shape == (700,)
    assert jnp.allclose(y_gather, ref_gather, atol=2e-4, rtol=2e-4)

    # 3) Unfused kernel, forced small tile with a ragged tail block.
    x1 = jax.random.normal(k_x1, (1300, hidden), jnp.float32)
    y1 = jax.block_until_ready(
        fc_unit_pallas(x1, unit.weight, unit.bias, tile_n=512, min_bytes_for_pallas=0))
    ref1 = x1 @ unit.weight + unit.bias[0]
    assert y1.shape == (1300,)
    assert jnp.allclose(y1, ref1, atol=2e-4, rtol=2e-4)

    # 4) Unfused kernel, auto tile selection (splits into >=2 blocks for megacore).
    x2 = jax.random.normal(k_x2, (4096, hidden), jnp.float32)
    y2 = jax.block_until_ready(
        fc_unit_pallas(x2, unit.weight, unit.bias, min_bytes_for_pallas=0))
    ref2 = x2 @ unit.weight + unit.bias[0]
    assert y2.shape == (4096,)
    assert jnp.allclose(y2, ref2, atol=2e-4, rtol=2e-4)

    print("KERNEL_OK")
</pallas_src>

<mosaic_0001>
module attributes {stable_mosaic.version = 11 : i64} {
  func.func @_fc_gather_kernel(%arg0: i32, %arg1: memref<768xi32, #tpu.memory_space<smem>>, %arg2: memref<640x32xf32, #tpu.memory_space<any>>, %arg3: memref<8x32xf32, #tpu.memory_space<vmem>>, %arg4: memref<1xf32, #tpu.memory_space<smem>>, %arg5: memref<1x256xf32, #tpu.memory_space<vmem>>, %arg6: memref<256x32xf32, #tpu.memory_space<vmem>>, %arg7: memref<!tpu.dma_semaphore, #tpu.memory_space<semaphore_mem>>) attributes {dimension_semantics = [#tpu.dimension_semantics<arbitrary>], iteration_bounds = array<i64: 3>, scalar_prefetch = 1 : i64, scratch_operands = 2 : i64, tpu.core_type = #tpu.core_type<tc>, window_params = [{}, {pipeline_mode = #tpu.pipeline_mode<synchronous>, transform_indices = @transform_1, window_bounds = array<i64: 8, 32>}, {transform_indices = @transform_2, window_bounds = array<i64: 1>}, {transform_indices = @transform_3, window_bounds = array<i64: 1, 256>}]} {
    %c256_i32 = arith.constant 256 : i32
    %0 = arith.muli %arg0, %c256_i32 : i32
    %c0_i32 = arith.constant 0 : i32
    %c256_i32_0 = arith.constant 256 : i32
    %1 = arith.addi %c0_i32, %c256_i32_0 : i32
    %c1_i32 = arith.constant 1 : i32
    scf.for %arg8 = %c0_i32 to %1 step %c1_i32  : i32 {
      %c1_i32_12 = arith.constant 1 : i32
      %11 = arith.muli %arg8, %c1_i32_12 : i32
      %c0_i32_13 = arith.constant 0 : i32
      %12 = arith.addi %c0_i32_13, %11 : i32
      %13 = arith.addi %0, %12 : i32
      %14 = arith.index_cast %13 : i32 to index
      %15 = memref.load %arg1[%14] : memref<768xi32, #tpu.memory_space<smem>>
      %c0_i32_14 = arith.constant 0 : i32
      %16 = tpu.memref_slice %arg2[%15, %c0_i32_14] : memref<640x32xf32, #tpu.memory_space<any>> -> memref<1x32xf32, #tpu.memory_space<any>>
      %c0_i32_15 = arith.constant 0 : i32
      %17 = tpu.memref_slice %arg6[%12, %c0_i32_15] : memref<256x32xf32, #tpu.memory_space<vmem>> -> memref<1x32xf32, #tpu.memory_space<vmem>>
      tpu.enqueue_dma source(%16 : memref<1x32xf32, #tpu.memory_space<any>>) target(%17 : memref<1x32xf32, #tpu.memory_space<vmem>>) target_semaphore(%arg7 : memref<!tpu.dma_semaphore, #tpu.memory_space<semaphore_mem>>)
    }
    %c256_i32_1 = arith.constant 256 : i32
    %c0_i32_2 = arith.constant 0 : i32
    %c256_i32_3 = arith.constant 256 : i32
    %2 = arith.addi %c0_i32_2, %c256_i32_3 : i32
    %c1_i32_4 = arith.constant 1 : i32
    scf.for %arg8 = %c0_i32_2 to %2 step %c1_i32_4  : i32 {
      %c1_i32_12 = arith.constant 1 : i32
      %11 = arith.muli %arg8, %c1_i32_12 : i32
      %c0_i32_13 = arith.constant 0 : i32
      %12 = arith.addi %c0_i32_13, %11 : i32
      %c0_i32_14 = arith.constant 0 : i32
      %c0_i32_15 = arith.constant 0 : i32
      %13 = tpu.memref_slice %arg2[%c0_i32_14, %c0_i32_15] : memref<640x32xf32, #tpu.memory_space<any>> -> memref<1x32xf32, #tpu.memory_space<any>>
      %c0_i32_16 = arith.constant 0 : i32
      %14 = tpu.memref_slice %arg6[%12, %c0_i32_16] : memref<256x32xf32, #tpu.memory_space<vmem>> -> memref<1x32xf32, #tpu.memory_space<vmem>>
      tpu.wait_dma2 semaphore(%arg7 : memref<!tpu.dma_semaphore, #tpu.memory_space<semaphore_mem>>) src(%13 : memref<1x32xf32, #tpu.memory_space<any>>) dst(%14 : memref<1x32xf32, #tpu.memory_space<vmem>>)
    }
    %c256_i32_5 = arith.constant 256 : i32
    %c0 = arith.constant 0 : index
    %c0_6 = arith.constant 0 : index
    %3 = vector.load %arg6[%c0, %c0_6] : memref<256x32xf32, #tpu.memory_space<vmem>>, vector<256x32xf32>
    %c0_7 = arith.constant 0 : index
    %c0_8 = arith.constant 0 : index
    %4 = vector.load %arg3[%c0_7, %c0_8] : memref<8x32xf32, #tpu.memory_space<vmem>>, vector<8x32xf32>
    %cst = arith.constant dense<0.000000e+00> : vector<8x256xf32>
    %5 = tpu.matmul %4, %3, %cst {dimension_numbers = #tpu.dot_dimension_numbers<[1], [1], [0], [0], [0, 0, 1, 0], [], []>} : vector<8x32xf32>, vector<256x32xf32>, vector<8x256xf32> -> vector<8x256xf32>
    %6 = vector.extract_strided_slice %5 {offsets = [0, 0], sizes = [1, 256], strides = [1, 1]} : vector<8x256xf32> to vector<1x256xf32>
    %c0_9 = arith.constant 0 : index
    %7 = memref.load %arg4[%c0_9] : memref<1xf32, #tpu.memory_space<smem>>
    %8 = vector.broadcast %7 : f32 to vector<1x256xf32>
    %9 = arith.addf %6, %8 : vector<1x256xf32>
    %c0_10 = arith.constant 0 : index
    %c0_11 = arith.constant 0 : index
    %10 = vector.load %arg5[%c0_10, %c0_11] : memref<1x256xf32, #tpu.memory_space<vmem>>, vector<1x256xf32>
    tpu.vector_store %arg5[%c0_10, %c0_11], %9 {strides = array<i32>} : memref<1x256xf32, #tpu.memory_space<vmem>>, vector<1x256xf32>,
    return
  }
  func.func @transform_1(%arg0: i32, %arg1: memref<768xi32, #tpu.memory_space<smem>>) -> (i32, i32) {
    %c0_i32 = arith.constant 0 : i32
    %c0_i32_0 = arith.constant 0 : i32
    %c0_i32_1 = arith.constant 0 : i32
    return %c0_i32, %c0_i32_0 : i32, i32
  }
  func.func @transform_2(%arg0: i32, %arg1: memref<768xi32, #tpu.memory_space<smem>>) -> i32 {
    %c0_i32 = arith.constant 0 : i32
    %c0_i32_0 = arith.constant 0 : i32
    return %c0_i32 : i32
  }
  func.func @transform_3(%arg0: i32, %arg1: memref<768xi32, #tpu.memory_space<smem>>) -> (i32, i32) {
    %c0_i32 = arith.constant 0 : i32
    %c0_i32_0 = arith.constant 0 : i32
    return %c0_i32, %arg0 : i32, i32
  }
}

</mosaic_0001>

<llo_original>
// kernel: tpu_custom_call.1
$region0: #{tpu_custom_call.1}
  #allocation0 [shape = 'u32[]', space=smem, size = 0x4, offset = 0x4, fixed_abs, tag = 'smem constant byte address 0x4 - core index']
  #allocation1 [shape = 'u32[144,128]{1,0:T(1,128)}', space=vmem, size = 0x12000, scoped, tag = 'internal scratch']
  #allocation2 [shape = 'f32[256,32]{1,0:T(8,128)}', space=vmem, size = 0x20000, scoped, tag = 'scratch operand']
  #allocation3 [shape = 's32[1]{0}', space=sflag, size = 0x4, scoped, tag = 'scratch operand']
  #allocation4 [shape = 's32[1]{0}', space=sflag, size = 0x4, scoped, tag = 'scoped memory for tpu_custom_call.1']
  #allocation5 [shape = 'u8[3072]{0}', space=smem, size = 0xc00, scoped, tag = 'prefetched SMEM operand 0']
  #allocation6 [shape = 'f32[1]{0:T(128)S(6)}', space=smem, size = 0x200, scoped, tag = 'scoped memory for tpu_custom_call.1']
  #allocation9 [shape = 's32[]', space=sflag, size = 0x4, offset = 0, fixed_abs, tag = 'sflag constant byte address 0x0 - dummy sync flag']
  %s0 = inlined_call_operand.vmem [shape: s32[768], index: 0, kind: input, shape index: {}]
  %s1 = inlined_call_operand.vmem [shape: f32[640,32], index: 1, kind: input, shape index: {}]
  %s2 = inlined_call_operand.vmem [shape: f32[8,32], index: 2, kind: input, shape index: {}]
  %s3 = inlined_call_operand.<no memory space> [shape: f32[1], index: 3, kind: input, shape index: {}]
  %s4 = inlined_call_operand.hbm [shape: f32[1,768], index: 4, kind: output, shape index: {}]
  %s5 = sld [smem:[#allocation0]]
  $region85: #{tpu_custom_call.1} parent=0
    _
  %s7 = ssub.s32 1, %s5
  %s8 = scalar_select 0, %s7, %s5
  %s9 = sshll.u32 %s0, 4
  %s10 = int_to_ptr.vmem [resolvable:$true] %s9
  %12 = dma.vmem_to_smem %s10, 96, [#allocation5], [#allocation4]
  %13 = sst [smem:[#allocation6]] %s3
  %14 = dma.done [#allocation4], 96
  %15 = sfence
  $region1: #{tpu_custom_call.1} parent=0
    #allocation7 [shape = 'u8[2048]{0}', space=vmem, size = 0x800, scoped, tag = 'output window, operand 0']
    #allocation8 [shape = 's32[2]{0}', space=sflag, size = 0x8, scoped, tag = 'scoped memory for tpu_custom_call.1']
    %16 = vsyncpa [#allocation8], 0
    %s17 = scalar_lea.sflag [#allocation8], 1
    %18 = vsyncpa %s17, 0
    loop: start=0, step=1, limit=5
    $region2: #{tpu_custom_call.1} parent=1 // loop_pre_header
      _
    $region3: #{tpu_custom_call.1} parent=1 // loop_header
      %s20 = sphi 0, %s24
      %p21 = scmp.ge.s32.totalorder %s20, 5
      %s28 = sphi 0, %s28
      %s30 = sphi 0, %s28
      %s31 = sphi 0, %s30
      %s45 = sphi 0, %s31
      %s49 = sphi 0, %s49
      %s51 = sphi 0, %s49
      %s52 = sphi 0, %s51
      %s66 = sphi 0, %s52
      %s72 = sphi 0, %s74
      %s75 = sphi 0, %s72
      %s76 = sphi 0, %s75
      %s92 = sphi 0, %s76
    $region4: #{tpu_custom_call.1} parent=1 // loop_header_branch
      %23 = sbr.rel (%p21) target = $region8
    $region5: #{tpu_custom_call.1} parent=1 // loop_body
      %s25 = ssub.s32 %s20, 1
      %s26 = ssub.s32 %s20, 2
      %s27 = sadd.s32 %s20, 1
      %s29 = sadd.s32 %s28, 1
      %p32 = scmp.eq.s32.totalorder %s20, 2
      %p33 = scmp.ne.s32.totalorder %s28, %s30
      %p34 = scmp.eq.s32.totalorder %s20, 0
      %p35 = por %p33, %p34
      %p36 = scmp.ne.s32.totalorder %s28, %s30
      %p37 = scmp.eq.s32.totalorder %s25, 2
      %p38 = por %p36, %p37
      %p39 = scmp.ne.s32.totalorder %s30, %s31
      %p40 = scmp.eq.s32.totalorder %s25, 0
      %p41 = por %p39, %p40
      %p42 = scmp.ne.s32.totalorder %s30, %s31
      %p43 = scmp.eq.s32.totalorder %s26, 2
      %p44 = por %p42, %p43
      %p46 = scmp.ne.s32.totalorder %s31, %s45
      %p47 = scmp.eq.s32.totalorder %s26, 0
      %p48 = por %p46, %p47
      %s50 = sadd.s32 %s49, 1
      %p53 = scmp.eq.s32.totalorder %s20, 2
      %p54 = scmp.ne.s32.totalorder %s49, %s51
      %p55 = scmp.eq.s32.totalorder %s20, 0
      %p56 = por %p54, %p55
      %p57 = scmp.ne.s32.totalorder %s49, %s51
      %p58 = scmp.eq.s32.totalorder %s25, 2
      %p59 = por %p57, %p58
      %p60 = scmp.ne.s32.totalorder %s51, %s52
      %p61 = scmp.eq.s32.totalorder %s25, 0
      %p62 = por %p60, %p61
      %p63 = scmp.ne.s32.totalorder %s51, %s52
      %p64 = scmp.eq.s32.totalorder %s26, 2
      %p65 = por %p63, %p64
      %p67 = scmp.ne.s32.totalorder %s52, %s66
      %p68 = scmp.eq.s32.totalorder %s26, 0
      %p69 = por %p67, %p68
      %s70 = ssub.s32 %s20, %s27
      %p71 = scmp.eq.s32.totalorder %s70, 0
      %s73 = sadd.s32 %s72, 1
      %s74 = scalar_select %p71, %s72, %s73
      %p77 = pneg %p71
      %p78 = scmp.eq.s32.totalorder %s20, 2
      %p79 = por %p77, %p78
      %p80 = scmp.ne.s32.totalorder %s72, %s75
      %p81 = scmp.eq.s32.totalorder %s20, 0
      %p82 = por %p80, %p81
      %p83 = scmp.ne.s32.totalorder %s72, %s75
      %p84 = scmp.eq.s32.totalorder %s25, 2
      %p85 = por %p83, %p84
      %p86 = scmp.ne.s32.totalorder %s75, %s76
      %p87 = scmp.eq.s32.totalorder %s25, 0
      %p88 = por %p86, %p87
      %p89 = scmp.ne.s32.totalorder %s75, %s76
      %p90 = scmp.eq.s32.totalorder %s26, 2
      %p91 = por %p89, %p90
      %p93 = scmp.ne.s32.totalorder %s76, %s92
      %p94 = scmp.eq.s32.totalorder %s26, 0
      %p95 = por %p93, %p94
      %p96 = scmp.le.s32.totalorder 1, %s20
      %p97 = scmp.lt.s32.totalorder %s20, 4
      %p98 = pnand %p96, %p97
      %p99 = pneg %p98
      // Predicated region
      $region9: #{tpu_custom_call.1} parent=5 // pred_check
        _
      $region10: #{tpu_custom_call.1} parent=5 // pred_check_branch
        %101 = sbr.rel (%p98) target = $region12
      $region11: #{tpu_custom_call.1} parent=5 // pred_region
        %s102 = ssub.s32 %s20, 1
        // Predicated region
        $region13: #{tpu_custom_call.1} parent=11 // pred_check
          %p103 = pneg %p41
        $region14: #{tpu_custom_call.1} parent=11 // pred_check_branch
          %105 = sbr.rel (%p103) target = $region16
        $region15: #{tpu_custom_call.1} parent=11 // pred_region
          _
        $region16: #{tpu_custom_call.1} parent=11 // pred_fallthru
          _
        // Predicated region
        $region17: #{tpu_custom_call.1} parent=11 // pred_check
          %p106 = pneg %p62
        $region18: #{tpu_custom_call.1} parent=11 // pred_check_branch
          %108 = sbr.rel (%p106) target = $region20
        $region19: #{tpu_custom_call.1} parent=11 // pred_region
          _
        $region20: #{tpu_custom_call.1} parent=11 // pred_fallthru
          _
      $region12: #{tpu_custom_call.1} parent=5 // pred_fallthru
        _
      %p109 = scmp.lt.s32.totalorder %s20, 3
      // Predicated region
      $region21: #{tpu_custom_call.1} parent=5 // pred_check
        %p110 = pneg %p109
      $region22: #{tpu_custom_call.1} parent=5 // pred_check_branch
        %112 = sbr.rel (%p110) target = $region24
      $region23: #{tpu_custom_call.1} parent=5 // pred_region
        _
      $region24: #{tpu_custom_call.1} parent=5 // pred_fallthru
        _
      %p113 = scmp.le.s32.totalorder 1, %s20
      %p114 = scmp.lt.s32.totalorder %s20, 4
      %p115 = pnand %p113, %p114
      %p116 = pneg %p115
      // Predicated region
      $region25: #{tpu_custom_call.1} parent=5 // pred_check
        _
      $region26: #{tpu_custom_call.1} parent=5 // pred_check_branch
        %118 = sbr.rel (%p115) target = $region28
      $region27: #{tpu_custom_call.1} parent=5 // pred_region
        %s119 = ssub.s32 %s20, 1
        %p120 = pneg %p41
        %p121 = pneg %p38
        %p122 = pneg %p62
        %p123 = pneg %p59
        %p124 = pneg %p88
        %p125 = pneg %p85
        %s126 = sand.u32 %s75, 1
        %s127 = scalar_lea.sflag [#allocation8], %s126
        %s128 = sand.u32 %s75, 1
        %s129 = smul.addr %s128, 2
        %s130 = scalar_lea.vmem [#allocation7], %s129
        %s131 = smul.u32 2, %s25
        %s132 = smul.u32 %s25, 256
        loop: start=0, step=1, limit=256
        $region29: #{tpu_custom_call.1} parent=27 // loop_pre_header
          _
        $region30: #{tpu_custom_call.1} parent=27 // loop_header
          %s134 = sphi 0, %s138
          %p135 = scmp.ge.s32.totalorder %s134, 256
        $region31: #{tpu_custom_call.1} parent=27 // loop_header_branch
          %137 = sbr.rel (%p135) target = $region35
        $region32: #{tpu_custom_call.1} parent=27 // loop_body
          %s139 = sadd.s32 %s132, %s134
          %s140 = sld [smem:[#allocation5 + %s139]]
          %s141 = scalar_lea.vmem %s1, %s140
          %s142 = scalar_lea.vmem [#allocation2], %s134
          %p144 = scmp.lt.u32.totalorder 1, 8
          %p145 = pneg %p144
          // Predicated region
          $region36: #{tpu_custom_call.1} parent=32 // pred_check
            _
          $region37: #{tpu_custom_call.1} parent=32 // pred_check_branch
            %147 = sbr.rel (%p144) target = $region39
          $region38: #{tpu_custom_call.1} parent=32 // pred_region
            %s162 = sand.u32 1, 7
            %p163 = scmp.eq.s32.totalorder %s162, 0
            %p164 = pneg %p163
            // Predicated region
            $region51: #{tpu_custom_call.1} parent=38 // pred_check
              _
            $region52: #{tpu_custom_call.1} parent=38 // pred_check_branch
              %166 = sbr.rel (%p163) target = $region54
            $region53: #{tpu_custom_call.1} parent=38 // pred_region
              %s167 = sand.u32 1, 7
              %s168 = ssub.s32 1, %s167
              %s169 = scalar_lea.vmem %s141, %s168
              %s170 = ssub.s32 1, %s167
              %s171 = scalar_lea.vmem %s142, %s170 [#allocation2]
              %s172 = sshllo.u32 0, %s167
              loop: start=0, step=1, limit=1
              $region55: #{tpu_custom_call.1} parent=53 // loop_pre_header
                _
              $region56: #{tpu_custom_call.1} parent=53 // loop_header
                %s174 = sphi 0, %s178
                %p175 = scmp.ge.s32.totalorder %s174, 1
                %s179 = sphi %s169, %s169
                %s180 = sphi %s171, %s171
              $region57: #{tpu_custom_call.1} parent=53 // loop_header_branch
                %177 = sbr.rel (%p175) target = $region61
              $region58: #{tpu_custom_call.1} parent=53 // loop_body
                %v181 = vld [vmem:[%s179] sm:%s172]
                %182 = vst [vmem:[%s180] sm:%s172] %v181
              $region59: #{tpu_custom_call.1} parent=53 // loop_footer
                %s178 = sadd.s32 1, %s174
              $region60: #{tpu_custom_call.1} parent=53 // loop_footer_branch
                %173 = sbr.rel target = $region56
              $region61: #{tpu_custom_call.1} parent=53 // loop_exit
                _
            $region54: #{tpu_custom_call.1} parent=38 // pred_fallthru
              _
          $region39: #{tpu_custom_call.1} parent=32 // pred_fallthru
            _
          // Predicated region
          $region40: #{tpu_custom_call.1} parent=32 // pred_check
            %p148 = pneg %p144
          $region41: #{tpu_custom_call.1} parent=32 // pred_check_branch
            %150 = sbr.rel (%p148) target = $region43
          $region42: #{tpu_custom_call.1} parent=32 // pred_region
            %s151 = sshllo.u32 0, 1
            loop: start=0, step=1, limit=1
            $region44: #{tpu_custom_call.1} parent=42 // loop_pre_header
              _
            $region45: #{tpu_custom_call.1} parent=42 // loop_header
              %s153 = sphi 0, %s157
              %p154 = scmp.ge.s32.totalorder %s153, 1
              %s158 = sphi %s141, %s141
              %s159 = sphi %s142, %s142
            $region46: #{tpu_custom_call.1} parent=42 // loop_header_branch
              %156 = sbr.rel (%p154) target = $region50
            $region47: #{tpu_custom_call.1} parent=42 // loop_body
              %v160 = vld [vmem:[%s158] sm:%s151]
              %161 = vst [vmem:[%s159] sm:%s151] %v160
            $region48: #{tpu_custom_call.1} parent=42 // loop_footer
              %s157 = sadd.s32 1, %s153
            $region49: #{tpu_custom_call.1} parent=42 // loop_footer_branch
              %152 = sbr.rel target = $region45
            $region50: #{tpu_custom_call.1} parent=42 // loop_exit
              _
          $region43: #{tpu_custom_call.1} parent=32 // pred_fallthru
            _
          // Predicated region
          $region62: #{tpu_custom_call.1} parent=32 // pred_check
            _
          $region63: #{tpu_custom_call.1} parent=32 // pred_check_branch
            %185 = sbr.rel (0) target = $region65
          $region64: #{tpu_custom_call.1} parent=32 // pred_region
            %186 = vsyncadd [#allocation3], 16
          $region65: #{tpu_custom_call.1} parent=32 // pred_fallthru
            _
        $region33: #{tpu_custom_call.1} parent=27 // loop_footer
          %s138 = sadd.s32 1, %s134
        $region34: #{tpu_custom_call.1} parent=27 // loop_footer_branch
          %133 = sbr.rel target = $region30
        $region35: #{tpu_custom_call.1} parent=27 // loop_exit
          _
        loop: start=0, step=1, limit=256
        $region66: #{tpu_custom_call.1} parent=27 // loop_pre_header
          _
        $region67: #{tpu_custom_call.1} parent=27 // loop_header
          %s188 = sphi 0, %s192
          %p189 = scmp.ge.s32.totalorder %s188, 256
        $region68: #{tpu_custom_call.1} parent=27 // loop_header_branch
          %191 = sbr.rel (%p189) target = $region72
        $region69: #{tpu_custom_call.1} parent=27 // loop_body
          %s193 = smul.u32 1, 1
          %s194 = sshll.u32 %s193, 4
          %195 = dma.done [#allocation3], %s194
        $region70: #{tpu_custom_call.1} parent=27 // loop_footer
          %s192 = sadd.s32 1, %s188
        $region71: #{tpu_custom_call.1} parent=27 // loop_footer_branch
          %187 = sbr.rel target = $region67
        $region72: #{tpu_custom_call.1} parent=27 // loop_exit
          _
        %v196 = vld [vmem:[#allocation2] sm:$0xff]
        %v197 = vld [vmem:[#allocation2 + $0x8] sm:$0xff]
        %v198 = vld [vmem:[#allocation2 + $0x10] sm:$0xff]
        %v199 = vld [vmem:[#allocation2 + $0x18] sm:$0xff]
        %v200 = vld [vmem:[#allocation2 + $0x20] sm:$0xff]
        %v201 = vld [vmem:[#allocation2 + $0x28] sm:$0xff]
        %v202 = vld [vmem:[#allocation2 + $0x30] sm:$0xff]
        %v203 = vld [vmem:[#allocation2 + $0x38] sm:$0xff]
        %v204 = vld [vmem:[#allocation2 + $0x40] sm:$0xff]
        %v205 = vld [vmem:[#allocation2 + $0x48] sm:$0xff]
        %v206 = vld [vmem:[#allocation2 + $0x50] sm:$0xff]
        %v207 = vld [vmem:[#allocation2 + $0x58] sm:$0xff]
        %v208 = vld [vmem:[#allocation2 + $0x60] sm:$0xff]
        %v209 = vld [vmem:[#allocation2 + $0x68] sm:$0xff]
        %v210 = vld [vmem:[#allocation2 + $0x70] sm:$0xff]
        %v211 = vld [vmem:[#allocation2 + $0x78] sm:$0xff]
        %v212 = vld [vmem:[#allocation2 + $0x80] sm:$0xff]
        %v213 = vld [vmem:[#allocation2 + $0x88] sm:$0xff]
        %v214 = vld [vmem:[#allocation2 + $0x90] sm:$0xff]
        %v215 = vld [vmem:[#allocation2 + $0x98] sm:$0xff]
        %v216 = vld [vmem:[#allocation2 + $0xa0] sm:$0xff]
        %v217 = vld [vmem:[#allocation2 + $0xa8] sm:$0xff]
        %v218 = vld [vmem:[#allocation2 + $0xb0] sm:$0xff]
        %v219 = vld [vmem:[#allocation2 + $0xb8] sm:$0xff]
        %v220 = vld [vmem:[#allocation2 + $0xc0] sm:$0xff]
        %v221 = vld [vmem:[#allocation2 + $0xc8] sm:$0xff]
        %v222 = vld [vmem:[#allocation2 + $0xd0] sm:$0xff]
        %v223 = vld [vmem:[#allocation2 + $0xd8] sm:$0xff]
        %v224 = vld [vmem:[#allocation2 + $0xe0] sm:$0xff]
        %v225 = vld [vmem:[#allocation2 + $0xe8] sm:$0xff]
        %v226 = vld [vmem:[#allocation2 + $0xf0] sm:$0xff]
        %v227 = vld [vmem:[#allocation2 + $0xf8] sm:$0xff]
        %v228 = vld [vmem:[%s2] sm:$0xff]
        %vm229 = vcmask 261120
        %v231 = vsel %vm229, %v228, 0
        %v234 = vsel %vm229, %v196, 0
        %v237 = vsel %vm229, %v197, 0
        %v240 = vsel %vm229, %v198, 0
        %v243 = vsel %vm229, %v199, 0
        %v246 = vsel %vm229, %v200, 0
        %v249 = vsel %vm229, %v201, 0
        %v252 = vsel %vm229, %v202, 0
        %v255 = vsel %vm229, %v203, 0
        %v258 = vsel %vm229, %v204, 0
        %v261 = vsel %vm229, %v205, 0
        %v264 = vsel %vm229, %v206, 0
        %v267 = vsel %vm229, %v207, 0
        %v270 = vsel %vm229, %v208, 0
        %v273 = vsel %vm229, %v209, 0
        %v276 = vsel %vm229, %v210, 0
        %v279 = vsel %vm229, %v211, 0
        %v282 = vsel %vm229, %v212, 0
        %v285 = vsel %vm229, %v213, 0
        %v288 = vsel %vm229, %v214, 0
        %v291 = vsel %vm229, %v215, 0
        %v294 = vsel %vm229, %v216, 0
        %v297 = vsel %vm229, %v217, 0
        %v300 = vsel %vm229, %v218, 0
        %v303 = vsel %vm229, %v219, 0
        %v306 = vsel %vm229, %v220, 0
        %v309 = vsel %vm229, %v221, 0
        %v312 = vsel %vm229, %v222, 0
        %v315 = vsel %vm229, %v223, 0
        %v318 = vsel %vm229, %v224, 0
        %v321 = vsel %vm229, %v225, 0
        %v324 = vsel %vm229, %v226, 0
        %v327 = vsel %vm229, %v227, 0
        %329 = vmatprep.subr.mxu0 0.0
        %330 = vmatpush1.xpose.msra.mxu0 %v234
        %331 = vmatprep.subr.mxu0 0.0
        %332 = vmatpush1.xpose.msra.mxu0 %v237
        %333 = vmatprep.subr.mxu0 0.0
        %334 = vmatpush1.xpose.msra.mxu0 %v240
        %335 = vmatprep.subr.mxu0 0.0
        %336 = vmatpush1.xpose.msra.mxu0 %v243
        %337 = vmatprep.subr.mxu0 0.0
        %338 = vmatpush1.xpose.msra.mxu0 %v246
        %339 = vmatprep.subr.mxu0 0.0
        %340 = vmatpush1.xpose.msra.mxu0 %v249
        %341 = vmatprep.subr.mxu0 0.0
        %342 = vmatpush1.xpose.msra.mxu0 %v252
        %343 = vmatprep.subr.mxu0 0.0
        %344 = vmatpush1.xpose.msra.mxu0 %v255
        %345 = vmatprep.subr.mxu0 0.0
        %346 = vmatpush1.xpose.msra.mxu0 %v258
        %347 = vmatprep.subr.mxu0 0.0
        %348 = vmatpush1.xpose.msra.mxu0 %v261
        %349 = vmatprep.subr.mxu0 0.0
        %350 = vmatpush1.xpose.msra.mxu0 %v264
        %351 = vmatprep.subr.mxu0 0.0
        %352 = vmatpush1.xpose.msra.mxu0 %v267
        %353 = vmatprep.subr.mxu0 0.0
        %354 = vmatpush1.xpose.msra.mxu0 %v270
        %355 = vmatprep.subr.mxu0 0.0
        %356 = vmatpush1.xpose.msra.mxu0 %v273
        %357 = vmatprep.subr.mxu0 0.0
        %358 = vmatpush1.xpose.msra.mxu0 %v276
        %359 = vmatprep.subr.mxu0 0.0
        %360 = vmatpush1.xpose.msra.mxu0 %v279
        %361 = vmatprep.subr.mxu0 0.0
        %362 = vmatpush1.xpose.msra.mxu0 %v282
        %363 = vmatprep.subr.mxu0 0.0
        %364 = vmatpush1.xpose.msra.mxu0 %v285
        %365 = vmatprep.subr.mxu0 0.0
        %366 = vmatpush1.xpose.msra.mxu0 %v288
        %367 = vmatprep.subr.mxu0 0.0
        %368 = vmatpush1.xpose.msra.mxu0 %v291
        %369 = vmatprep.subr.mxu0 0.0
        %370 = vmatpush1.xpose.msra.mxu0 %v294
        %371 = vmatprep.subr.mxu0 0.0
        %372 = vmatpush1.xpose.msra.mxu0 %v297
        %373 = vmatprep.subr.mxu0 0.0
        %374 = vmatpush1.xpose.msra.mxu0 %v300
        %375 = vmatprep.subr.mxu0 0.0
        %376 = vmatpush1.xpose.msra.mxu0 %v303
        %377 = vmatprep.subr.mxu0 0.0
        %378 = vmatpush1.xpose.msra.mxu0 %v306
        %379 = vmatprep.subr.mxu0 0.0
        %380 = vmatpush1.xpose.msra.mxu0 %v309
        %381 = vmatprep.subr.mxu0 0.0
        %382 = vmatpush1.xpose.msra.mxu0 %v312
        %383 = vmatprep.subr.mxu0 0.0
        %384 = vmatpush1.xpose.msra.mxu0 %v315
        %385 = vmatprep.subr.mxu0 0.0
        %386 = vmatpush1.xpose.msra.mxu0 %v318
        %387 = vmatprep.subr.mxu0 0.0
        %388 = vmatpush1.xpose.msra.mxu0 %v321
        %389 = vmatprep.subr.mxu0 0.0
        %390 = vmatpush1.xpose.msra.mxu0 %v324
        %391 = vmatprep.subr.mxu0 0.0
        %392 = vmatpush1.xpose.msra.mxu0 %v327
        %393 = vmatprep.mubr.f32.mxu0 0.0
        %394 = vmatmul.mubr.f32.gmra.mrb[0].mxu0 %v231
        %v395 = vpop.f32.mrb[0].mxu0
        %v396 = vadd.f32 0.0, %v395
        %v397 = vpop.f32.mrb[0].mxu0
        %v398 = vadd.f32 0.0, %v397
        %399 = vdwg.mxu0
        %s400 = sld [smem:[#allocation6]]
        %v401 = vstv %s400
        %v402 = vadd.f32 %v396, %v401
        %v403 = vadd.f32 %v398, %v401
        %v406 = vcombine.low %v402, %v403
        %v408 = vunpack.c.l.s4 1966171168
        %v409 = vunpack.c.0.s8 %v408
        %v410 = vlaneseq
        %v411 = vshrl.u32 %v410, 7
        %v412 = vsub.s32 %v409, %v411
        %v413 = vrot.slane %v406, %v412
        %v415 = vunpack.c.l.s4 1966171168
        %v416 = vunpack.c.0.s8 %v415
        %v417 = vlaneseq
        %v418 = vshrl.u32 %v417, 7
        %v419 = vsub.s32 %v416, %v418
        %v420 = vrot.slane %v413, %v419
        %v422 = vlaneseq
        %vm423 = vcmp.ge.s32.totalorder %v422, 0
        %vm424 = vcmp.lt.s32.totalorder %v422, 256
        %vm425 = vmand %vm423, %vm424
        %426 = vst.msk [vmem:[%s130] sm:$0x3] %vm425, %v420
        %s427 = sand.u32 %s75, 1
        %s428 = scalar_lea.sflag [#allocation8], %s427
        %s429 = sand.u32 %s75, 1
        %s430 = smul.addr %s429, 2
        %s431 = scalar_lea.vmem [#allocation7], %s430
        // Predicated region
        $region73: #{tpu_custom_call.1} parent=27 // pred_check
          %p432 = pneg %p85
        $region74: #{tpu_custom_call.1} parent=27 // pred_check_branch
          %434 = sbr.rel (%p432) target = $region76
        $region75: #{tpu_custom_call.1} parent=27 // pred_region
          %s435 = smul.u32 2, %s25
          %s437 = ssub.s32 32, 32
          %438 = vsyncadd %s428, %s437
          %s439 = smul.addr %s435, 16
          %s440 = scalar_lea.hbm %s4, %s439
          %s442 = sshll.u32 %s431, 4
          %s443 = int_to_ptr.vmem [resolvable:$true] %s442
          %445 = dma.vmem_to_hbm [thread:$0]  %s443, 32, %s440, %s428
        $region76: #{tpu_custom_call.1} parent=27 // pred_fallthru
          _
      $region28: #{tpu_custom_call.1} parent=5 // pred_fallthru
        _
      %p446 = scmp.le.s32.totalorder 2, %s20
      // Predicated region
      $region77: #{tpu_custom_call.1} parent=5 // pred_check
        %p447 = pneg %p446
      $region78: #{tpu_custom_call.1} parent=5 // pred_check_branch
        %449 = sbr.rel (%p447) target = $region80
      $region79: #{tpu_custom_call.1} parent=5 // pred_region
        %s450 = ssub.s32 %s20, 2
        // Predicated region
        $region81: #{tpu_custom_call.1} parent=79 // pred_check
          %p451 = pneg %p91
        $region82: #{tpu_custom_call.1} parent=79 // pred_check_branch
          %453 = sbr.rel (%p451) target = $region84
        $region83: #{tpu_custom_call.1} parent=79 // pred_region
          %s454 = sand.u32 %s76, 1
          %s455 = scalar_lea.sflag [#allocation8], %s454
          %s456 = sand.u32 %s76, 1
          %s457 = smul.addr %s456, 2
          %s458 = scalar_lea.vmem [#allocation7], %s457
          %459 = dma.done %s455, 32
        $region84: #{tpu_custom_call.1} parent=79 // pred_fallthru
          _
      $region80: #{tpu_custom_call.1} parent=5 // pred_fallthru
        _
    $region6: #{tpu_custom_call.1} parent=1 // loop_footer
      %s24 = sadd.s32 1, %s20
    $region7: #{tpu_custom_call.1} parent=1 // loop_footer_branch
      %19 = sbr.rel target = $region3
    $region8: #{tpu_custom_call.1} parent=1 // loop_exit
      _
    %460 = vsyncpa [#allocation8], 1
    %s461 = scalar_lea.sflag [#allocation8], 1
    %462 = vsyncpa %s461, 1
  %463 = vsyncmov [#allocation3]
  %s464 = vpop.sfrf %463
  %p465 = scmp.eq.s32.totalorder %s464, 0
  %p466 = pneg %p465
  %468 = shalt.err (%p466)

</llo_original>
